<compile_context>
chip_gen: v7x
topology: tpu7x:2x2x1
jax: 0.10.0
libtpu: 0.0.40
codegen_flags: <defaults>
</compile_context>

<pallas_src>
import functools

import jax
import jax.numpy as jnp
from jax import lax
from jax.experimental import pallas as pl
from jax.experimental.pallas import tpu as pltpu


# ---------------------------------------------------------------------------
# Helpers
# ---------------------------------------------------------------------------

def _foreach(n, body, *, unroll_limit=32, unroll=8):
    """Run side-effecting `body(r)` for r in [0, n).

    Fully unrolled in Python for short loops (keeps LLO scheduler visibility),
    partially-unrolled lax.fori_loop otherwise (bounds code size for big
    row blocks)."""
    if n <= unroll_limit:
        for r in range(n):
            body(r)
    else:
        def _body(r, carry):
            body(r)
            return carry
        lax.fori_loop(0, n, _body, 0, unroll=unroll)


def _row_multiple(dtype):
    """Sublane packing: rows per (8,128) tile — 8 f32, 16 bf16, 32 int8/fp8."""
    return max(8, 8 * (4 // jnp.dtype(dtype).itemsize))


def _pick_rows_per_block(seq_len, row_mult, max_rows=128):
    best = 0
    for t in range(row_mult, min(seq_len, max_rows) + 1, row_mult):
        if seq_len % t == 0:
            best = t
    if best == 0:
        raise ValueError(
            f"seq_len={seq_len} must be a multiple of {row_mult} for this kernel")
    return best


def _pick_chunk(rows_per_block, max_chunk=32):
    best = 8
    for c in range(8, min(rows_per_block, max_chunk) + 1, 8):
        if rows_per_block % c == 0:
            best = c
    return best


# ---------------------------------------------------------------------------
# Kernel 1 — small-table fast path: the whole embedding table is a resident
# VMEM block; rows are gathered with dynamic sublane slices (no per-token DMA).
# ---------------------------------------------------------------------------

def _embed_vmem_kernel(ids_ref, emb_ref, pe_ref, out_ref, *,
                       rows_per_block, n_seq_blocks, n_inner):
    blk = pl.program_id(0) * n_inner + pl.program_id(1)
    base = blk * rows_per_block
    pe_base = pl.multiple_of((blk % n_seq_blocks) * rows_per_block, 8)

    def gather_row(r):
        tok = ids_ref[base + r]                                  # SMEM scalar
        out_ref[pl.ds(r, 1), :] = emb_ref[pl.ds(tok, 1), :]      # gather row

    _foreach(rows_per_block, gather_row)

    # One wide, lane-dense add + store for the whole block.
    out_ref[...] = (out_ref[...] +
                    pe_ref[pl.ds(pe_base, rows_per_block), :]).astype(out_ref.dtype)


# ---------------------------------------------------------------------------
# Kernel 2 — large-table path: table stays in HBM; rows gathered with per-row
# DMAs, double-buffered across grid steps and consumed chunk-by-chunk.
# ---------------------------------------------------------------------------

def _embed_hbm_kernel(ids_ref, emb_hbm, pe_ref, out_ref, buf, sems, *,
                      rows_per_block, chunk, n_seq_blocks, n_inner):
    i = pl.program_id(1)
    blk = pl.program_id(0) * n_inner + i
    n_chunks = rows_per_block // chunk
    slot = i % 2

    def issue_block(block_idx, to_slot):
        base = block_idx * rows_per_block

        def issue_row(r):
            tok = ids_ref[base + r]                              # SMEM scalar
            pltpu.make_async_copy(
                emb_hbm.at[pl.ds(tok, 1), :],
                buf.at[to_slot, pl.ds(r, 1), :],
                sems.at[to_slot, r // chunk],
            ).start()

        _foreach(rows_per_block, issue_row)

    # Prologue: first inner step on this core gathers its own block into slot 0.
    @pl.when(i == 0)
    def _():
        issue_block(blk, 0)

    # Cross-step double-buffering: prefetch the NEXT block into the other slot
    # before touching this one, so its gather latency hides behind this step's
    # waits / add / writeback.
    @pl.when(i + 1 < n_inner)
    def _():
        issue_block(blk + 1, 1 - slot)

    pe_base = pl.multiple_of((blk % n_seq_blocks) * rows_per_block, 8)

    # Consume chunk-by-chunk: wait for one chunk's rows, add PE, store, move on
    # while later chunks (and the next block) are still in flight.
    for c in range(n_chunks):
        def wait_row(_r, _c=c):
            pltpu.make_async_copy(               # same (1, D) shape as issue
                emb_hbm.at[pl.ds(0, 1), :],
                buf.at[slot, pl.ds(0, 1), :],
                sems.at[slot, _c],
            ).wait()

        _foreach(chunk, wait_row)
        rows = pl.ds(c * chunk, chunk)
        out_ref[rows, :] = (
            buf[slot, rows, :] +
            pe_ref[pl.ds(pe_base + c * chunk, chunk), :]
        ).astype(out_ref.dtype)


# ---------------------------------------------------------------------------
# Wrapper
# ---------------------------------------------------------------------------

def transformer_embedding(ids, emb_table, pe_table, *,
                          rows_per_block=None, table_in_vmem=None):
    """TransformerEmbedding.forward: token-embedding gather + positional add.

    ids       : (B, S) integer token ids
    emb_table : (V, D) token-embedding weight (nn.Embedding.weight)
    pe_table  : (max_len, D) precomputed sinusoidal positional encodings
    """
    B, S = ids.shape
    V, D = emb_table.shape
    if S > pe_table.shape[0]:
        raise ValueError(f"sequence length {S} exceeds max_len {pe_table.shape[0]}")

    dtype = emb_table.dtype
    itemsize = jnp.dtype(dtype).itemsize
    pe = pe_table[:S].astype(dtype)                         # (S, D)
    N = B * S

    row_mult = _row_multiple(dtype)
    tr = rows_per_block or _pick_rows_per_block(S, row_mult)
    if S % tr or tr % row_mult:
        raise ValueError(
            f"rows_per_block={tr} must divide S={S} and be a multiple of {row_mult}")
    n_seq_blocks = S // tr
    n_blocks = N // tr

    # Outer "parallel" axis: v7x's two TensorCores each take a contiguous half
    # of the blocks; on single-TC chips it is just an outer sequential loop.
    n_outer = 2 if (n_blocks % 2 == 0 and n_blocks >= 4) else 1
    n_inner = n_blocks // n_outer

    # OOB guard hoisted out of the kernel (cheap XLA clip on an (N,) vector).
    ids_flat = jnp.clip(ids.reshape(N).astype(jnp.int32), 0, V - 1)

    # Conservative VMEM estimate (BlockSpec inputs are double-buffered).
    table_bytes = 2 * V * D * itemsize
    pe_bytes = 2 * S * D * itemsize
    out_bytes = 2 * tr * D * itemsize
    if table_in_vmem is None:
        table_in_vmem = (table_bytes + pe_bytes + out_bytes) <= 12 * 2**20

    if table_in_vmem:
        kernel = functools.partial(
            _embed_vmem_kernel, rows_per_block=tr,
            n_seq_blocks=n_seq_blocks, n_inner=n_inner)
        in_specs = [
            pl.BlockSpec((V, D), lambda c, i, ids: (0, 0)),   # resident table
            pl.BlockSpec((S, D), lambda c, i, ids: (0, 0)),   # resident PE
        ]
        scratch_shapes = []
        table_traffic = V * D * itemsize
        vmem_est = table_bytes + pe_bytes + out_bytes
    else:
        chunk = _pick_chunk(tr)
        kernel = functools.partial(
            _embed_hbm_kernel, rows_per_block=tr, chunk=chunk,
            n_seq_blocks=n_seq_blocks, n_inner=n_inner)
        in_specs = [
            pl.BlockSpec(memory_space=pl.ANY),                # table stays in HBM
            # TODO(synk): for very long sequences where 2*S*D bytes no longer
            # fits VMEM, switch PE to a per-seq-block BlockSpec keyed on a
            # (S//tr, B) grid instead of a full-extent resident block.
            pl.BlockSpec((S, D), lambda c, i, ids: (0, 0)),   # resident PE
        ]
        scratch_shapes = [
            pltpu.VMEM((2, tr, D), dtype),                    # double-buffered gather dst
            pltpu.SemaphoreType.DMA((2, tr // chunk)),        # bounded sem pool
        ]
        table_traffic = N * D * itemsize
        vmem_est = pe_bytes + out_bytes + 2 * tr * D * itemsize

    compiler_kwargs = dict(dimension_semantics=("parallel", "arbitrary"))
    if vmem_est > 12 * 2**20:
        # Raise the scoped-VMEM limit above v5e's 16 MiB default; keep headroom
        # under v7x's 64 MiB physical VMEM.
        compiler_kwargs["vmem_limit_bytes"] = int(min(vmem_est * 3 // 2, 56 * 2**20))

    cost = pl.CostEstimate(
        flops=N * D,                                          # one add per element
        transcendentals=0,
        bytes_accessed=table_traffic + (S * D + N * D) * itemsize + N * 4,
    )

    out_flat = pl.pallas_call(
        kernel,
        out_shape=jax.ShapeDtypeStruct((N, D), dtype),
        grid_spec=pltpu.PrefetchScalarGridSpec(
            num_scalar_prefetch=1,                            # ids -> SMEM
            grid=(n_outer, n_inner),
            in_specs=in_specs,
            out_specs=pl.BlockSpec((tr, D), lambda c, i, ids: (c * n_inner + i, 0)),
            scratch_shapes=scratch_shapes,
        ),
        compiler_params=pltpu.CompilerParams(**compiler_kwargs),
        cost_estimate=cost,
    )(ids_flat, emb_table, pe)

    return out_flat.reshape(B, S, D)


def make_sinusoidal_pe(max_len, d_model):
    pos = jnp.arange(max_len, dtype=jnp.float32)[:, None]
    i = jnp.arange(0, d_model, 2, dtype=jnp.float32)[None, :]
    angle = pos / jnp.power(10000.0, i / d_model)
    pe = jnp.zeros((max_len, d_model), jnp.float32)
    pe = pe.at[:, 0::2].set(jnp.sin(angle))
    pe = pe.at[:, 1::2].set(jnp.cos(angle))
    return pe


if __name__ == "__main__":
    keys = jax.random.split(jax.random.PRNGKey(0), 4)

    # ---- Tests 1/2: small config (batch=2, seq=8, vocab=32, d_model=32) ----
    B, S, V, D, max_len = 2, 8, 32, 32, 64
    ids = jax.random.randint(keys[0], (B, S), 0, V, dtype=jnp.int32)
    emb = jax.random.normal(keys[1], (V, D), dtype=jnp.float32)
    emb = emb.at[1].set(0.0)          # mimic a padding_idx row in TokenEmbedding
    pe = make_sinusoidal_pe(max_len, D)
    ref = jnp.take(emb, ids, axis=0) + pe[None, :S, :]

    out_fast = jax.block_until_ready(transformer_embedding(ids, emb, pe))
    assert out_fast.shape == (B, S, D) and out_fast.dtype == jnp.float32
    assert jnp.allclose(out_fast, ref, atol=1e-5), "VMEM fast path mismatch"

    out_hbm = jax.block_until_ready(
        transformer_embedding(ids, emb, pe, table_in_vmem=False))
    assert jnp.allclose(out_hbm, ref, atol=1e-5), "HBM gather path mismatch"

    # ---- Test 3: exercises fori_loop rows, chunked semaphores, cross-step
    #              prefetch and the 2-way parallel outer split ----
    B2, S2, V2, D2 = 4, 64, 64, 128
    ids2 = jax.random.randint(keys[2], (B2, S2), 0, V2, dtype=jnp.int32)
    emb2 = jax.random.normal(keys[3], (V2, D2), dtype=jnp.float32)
    pe2 = make_sinusoidal_pe(128, D2)
    ref2 = jnp.take(emb2, ids2, axis=0) + pe2[None, :S2, :]

    out2_fast = jax.block_until_ready(transformer_embedding(ids2, emb2, pe2))
    out2_hbm = jax.block_until_ready(
        transformer_embedding(ids2, emb2, pe2, table_in_vmem=False))
    assert jnp.allclose(out2_fast, ref2, atol=1e-5), "VMEM fast path mismatch (large)"
    assert jnp.allclose(out2_hbm, ref2, atol=1e-5), "HBM gather path mismatch (large)"

    print("KERNEL_OK")
</pallas_src>

<mosaic_0001>
module attributes {stable_mosaic.version = 11 : i64} {
  func.func @_embed_vmem_kernel(%arg0: i32, %arg1: i32, %arg2: memref<16xi32, #tpu.memory_space<smem>>, %arg3: memref<32x32xf32, #tpu.memory_space<vmem>>, %arg4: memref<8x32xf32, #tpu.memory_space<vmem>>, %arg5: memref<8x32xf32, #tpu.memory_space<vmem>>) attributes {dimension_semantics = [#tpu.dimension_semantics<parallel>, #tpu.dimension_semantics<arbitrary>], iteration_bounds = array<i64: 1, 2>, scalar_prefetch = 1 : i64, scratch_operands = 0 : i64, tpu.core_type = #tpu.core_type<tc>, window_params = [{pipeline_mode = #tpu.pipeline_mode<synchronous>, transform_indices = @transform_0, window_bounds = array<i64: 32, 32>}, {pipeline_mode = #tpu.pipeline_mode<synchronous>, transform_indices = @transform_1, window_bounds = array<i64: 8, 32>}, {transform_indices = @transform_2, window_bounds = array<i64: 8, 32>}]} {
    %c2_i32 = arith.constant 2 : i32
    %0 = arith.muli %arg0, %c2_i32 : i32
    %1 = arith.addi %0, %arg1 : i32
    %c8_i32 = arith.constant 8 : i32
    %2 = arith.muli %1, %c8_i32 : i32
    %c1_i32 = arith.constant 1 : i32
    %c0_i32 = arith.constant 0 : i32
    %3 = arith.cmpi eq, %c1_i32, %c0_i32 : i32
    %c1_i32_0 = arith.constant 1 : i32
    %4 = arith.select %3, %c1_i32_0, %c1_i32 : i32
    %5 = arith.remsi %1, %4 : i32
    %c0_i32_1 = arith.constant 0 : i32
    %6 = arith.cmpi ne, %5, %c0_i32_1 : i32
    %c0_i32_2 = arith.constant 0 : i32
    %7 = arith.cmpi slt, %5, %c0_i32_2 : i32
    %c0_i32_3 = arith.constant 0 : i32
    %8 = arith.cmpi slt, %4, %c0_i32_3 : i32
    %9 = arith.xori %7, %8 : i1
    %10 = arith.andi %9, %6 : i1
    %11 = arith.addi %5, %4 : i32
    %12 = arith.select %10, %11, %5 : i32
    %c8_i32_4 = arith.constant 8 : i32
    %13 = arith.muli %12, %c8_i32_4 : i32
    %14 = tpu.assume_multiple %13, 8 : i32
    %c0_i32_5 = arith.constant 0 : i32
    %15 = arith.addi %2, %c0_i32_5 : i32
    %16 = arith.index_cast %15 : i32 to index
    %17 = memref.load %arg2[%16] : memref<16xi32, #tpu.memory_space<smem>>
    %18 = arith.index_cast %17 : i32 to index
    %c0 = arith.constant 0 : index
    %19 = vector.load %arg3[%18, %c0] : memref<32x32xf32, #tpu.memory_space<vmem>>, vector<1x32xf32>
    %c0_6 = arith.constant 0 : index
    %c0_7 = arith.constant 0 : index
    %20 = vector.load %arg5[%c0_6, %c0_7] : memref<8x32xf32, #tpu.memory_space<vmem>>, vector<1x32xf32>
    tpu.vector_store %arg5[%c0_6, %c0_7], %19 {strides = array<i32>} : memref<8x32xf32, #tpu.memory_space<vmem>>, vector<1x32xf32>,
    %c1_i32_8 = arith.constant 1 : i32
    %21 = arith.addi %2, %c1_i32_8 : i32
    %22 = arith.index_cast %21 : i32 to index
    %23 = memref.load %arg2[%22] : memref<16xi32, #tpu.memory_space<smem>>
    %24 = arith.index_cast %23 : i32 to index
    %c0_9 = arith.constant 0 : index
    %25 = vector.load %arg3[%24, %c0_9] : memref<32x32xf32, #tpu.memory_space<vmem>>, vector<1x32xf32>
    %c1 = arith.constant 1 : index
    %c0_10 = arith.constant 0 : index
    %26 = vector.load %arg5[%c1, %c0_10] : memref<8x32xf32, #tpu.memory_space<vmem>>, vector<1x32xf32>
    tpu.vector_store %arg5[%c1, %c0_10], %25 {strides = array<i32>} : memref<8x32xf32, #tpu.memory_space<vmem>>, vector<1x32xf32>,
    %c2_i32_11 = arith.constant 2 : i32
    %27 = arith.addi %2, %c2_i32_11 : i32
    %28 = arith.index_cast %27 : i32 to index
    %29 = memref.load %arg2[%28] : memref<16xi32, #tpu.memory_space<smem>>
    %30 = arith.index_cast %29 : i32 to index
    %c0_12 = arith.constant 0 : index
    %31 = vector.load %arg3[%30, %c0_12] : memref<32x32xf32, #tpu.memory_space<vmem>>, vector<1x32xf32>
    %c2 = arith.constant 2 : index
    %c0_13 = arith.constant 0 : index
    %32 = vector.load %arg5[%c2, %c0_13] : memref<8x32xf32, #tpu.memory_space<vmem>>, vector<1x32xf32>
    tpu.vector_store %arg5[%c2, %c0_13], %31 {strides = array<i32>} : memref<8x32xf32, #tpu.memory_space<vmem>>, vector<1x32xf32>,
    %c3_i32 = arith.constant 3 : i32
    %33 = arith.addi %2, %c3_i32 : i32
    %34 = arith.index_cast %33 : i32 to index
    %35 = memref.load %arg2[%34] : memref<16xi32, #tpu.memory_space<smem>>
    %36 = arith.index_cast %35 : i32 to index
    %c0_14 = arith.constant 0 : index
    %37 = vector.load %arg3[%36, %c0_14] : memref<32x32xf32, #tpu.memory_space<vmem>>, vector<1x32xf32>
    %c3 = arith.constant 3 : index
    %c0_15 = arith.constant 0 : index
    %38 = vector.load %arg5[%c3, %c0_15] : memref<8x32xf32, #tpu.memory_space<vmem>>, vector<1x32xf32>
    tpu.vector_store %arg5[%c3, %c0_15], %37 {strides = array<i32>} : memref<8x32xf32, #tpu.memory_space<vmem>>, vector<1x32xf32>,
    %c4_i32 = arith.constant 4 : i32
    %39 = arith.addi %2, %c4_i32 : i32
    %40 = arith.index_cast %39 : i32 to index
    %41 = memref.load %arg2[%40] : memref<16xi32, #tpu.memory_space<smem>>
    %42 = arith.index_cast %41 : i32 to index
    %c0_16 = arith.constant 0 : index
    %43 = vector.load %arg3[%42, %c0_16] : memref<32x32xf32, #tpu.memory_space<vmem>>, vector<1x32xf32>
    %c4 = arith.constant 4 : index
    %c0_17 = arith.constant 0 : index
    %44 = vector.load %arg5[%c4, %c0_17] : memref<8x32xf32, #tpu.memory_space<vmem>>, vector<1x32xf32>
    tpu.vector_store %arg5[%c4, %c0_17], %43 {strides = array<i32>} : memref<8x32xf32, #tpu.memory_space<vmem>>, vector<1x32xf32>,
    %c5_i32 = arith.constant 5 : i32
    %45 = arith.addi %2, %c5_i32 : i32
    %46 = arith.index_cast %45 : i32 to index
    %47 = memref.load %arg2[%46] : memref<16xi32, #tpu.memory_space<smem>>
    %48 = arith.index_cast %47 : i32 to index
    %c0_18 = arith.constant 0 : index
    %49 = vector.load %arg3[%48, %c0_18] : memref<32x32xf32, #tpu.memory_space<vmem>>, vector<1x32xf32>
    %c5 = arith.constant 5 : index
    %c0_19 = arith.constant 0 : index
    %50 = vector.load %arg5[%c5, %c0_19] : memref<8x32xf32, #tpu.memory_space<vmem>>, vector<1x32xf32>
    tpu.vector_store %arg5[%c5, %c0_19], %49 {strides = array<i32>} : memref<8x32xf32, #tpu.memory_space<vmem>>, vector<1x32xf32>,
    %c6_i32 = arith.constant 6 : i32
    %51 = arith.addi %2, %c6_i32 : i32
    %52 = arith.index_cast %51 : i32 to index
    %53 = memref.load %arg2[%52] : memref<16xi32, #tpu.memory_space<smem>>
    %54 = arith.index_cast %53 : i32 to index
    %c0_20 = arith.constant 0 : index
    %55 = vector.load %arg3[%54, %c0_20] : memref<32x32xf32, #tpu.memory_space<vmem>>, vector<1x32xf32>
    %c6 = arith.constant 6 : index
    %c0_21 = arith.constant 0 : index
    %56 = vector.load %arg5[%c6, %c0_21] : memref<8x32xf32, #tpu.memory_space<vmem>>, vector<1x32xf32>
    tpu.vector_store %arg5[%c6, %c0_21], %55 {strides = array<i32>} : memref<8x32xf32, #tpu.memory_space<vmem>>, vector<1x32xf32>,
    %c7_i32 = arith.constant 7 : i32
    %57 = arith.addi %2, %c7_i32 : i32
    %58 = arith.index_cast %57 : i32 to index
    %59 = memref.load %arg2[%58] : memref<16xi32, #tpu.memory_space<smem>>
    %60 = arith.index_cast %59 : i32 to index
    %c0_22 = arith.constant 0 : index
    %61 = vector.load %arg3[%60, %c0_22] : memref<32x32xf32, #tpu.memory_space<vmem>>, vector<1x32xf32>
    %c7 = arith.constant 7 : index
    %c0_23 = arith.constant 0 : index
    %62 = vector.load %arg5[%c7, %c0_23] : memref<8x32xf32, #tpu.memory_space<vmem>>, vector<1x32xf32>
    tpu.vector_store %arg5[%c7, %c0_23], %61 {strides = array<i32>} : memref<8x32xf32, #tpu.memory_space<vmem>>, vector<1x32xf32>,
    %c0_24 = arith.constant 0 : index
    %c0_25 = arith.constant 0 : index
    %63 = vector.load %arg5[%c0_24, %c0_25] : memref<8x32xf32, #tpu.memory_space<vmem>>, vector<8x32xf32>
    %64 = arith.index_cast %14 : i32 to index
    %c0_26 = arith.constant 0 : index
    %65 = vector.load %arg4[%64, %c0_26] : memref<8x32xf32, #tpu.memory_space<vmem>>, vector<8x32xf32>
    %66 = arith.addf %63, %65 : vector<8x32xf32>
    %c0_27 = arith.constant 0 : index
    %c0_28 = arith.constant 0 : index
    %67 = vector.load %arg5[%c0_27, %c0_28] : memref<8x32xf32, #tpu.memory_space<vmem>>, vector<8x32xf32>
    tpu.vector_store %arg5[%c0_27, %c0_28], %66 {strides = array<i32>} : memref<8x32xf32, #tpu.memory_space<vmem>>, vector<8x32xf32>,
    return
  }
  func.func @transform_0(%arg0: i32, %arg1: i32, %arg2: memref<16xi32, #tpu.memory_space<smem>>) -> (i32, i32) {
    %c0_i32 = arith.constant 0 : i32
    %c0_i32_0 = arith.constant 0 : i32
    %c0_i32_1 = arith.constant 0 : i32
    return %c0_i32, %c0_i32_0 : i32, i32
  }
  func.func @transform_1(%arg0: i32, %arg1: i32, %arg2: memref<16xi32, #tpu.memory_space<smem>>) -> (i32, i32) {
    %c0_i32 = arith.constant 0 : i32
    %c0_i32_0 = arith.constant 0 : i32
    %c0_i32_1 = arith.constant 0 : i32
    return %c0_i32, %c0_i32_0 : i32, i32
  }
  func.func @transform_2(%arg0: i32, %arg1: i32, %arg2: memref<16xi32, #tpu.memory_space<smem>>) -> (i32, i32) {
    %c2_i32 = arith.constant 2 : i32
    %0 = arith.muli %arg0, %c2_i32 : i32
    %1 = arith.addi %0, %arg1 : i32
    %c0_i32 = arith.constant 0 : i32
    %c0_i32_0 = arith.constant 0 : i32
    return %1, %c0_i32 : i32, i32
  }
}

</mosaic_0001>

<llo_original>
// kernel: tpu_custom_call.1
$region0: #{tpu_custom_call.1}
  #allocation0 [shape = 'u32[]', space=smem, size = 0x4, offset = 0x4, fixed_abs, tag = 'smem constant byte address 0x4 - core index']
  #allocation1 [shape = 'u32[144,128]{1,0:T(1,128)}', space=vmem, size = 0x12000, scoped, tag = 'internal scratch']
  #allocation2 [shape = 's32[1]{0}', space=sflag, size = 0x4, scoped, tag = 'scoped memory for tpu_custom_call.1']
  #allocation3 [shape = 'u8[512]{0}', space=smem, size = 0x200, scoped, tag = 'prefetched SMEM operand 0']
  %s0 = inlined_call_operand.hbm [shape: s32[16], index: 0, kind: input, shape index: {}]
  %s1 = inlined_call_operand.hbm [shape: f32[32,32], index: 1, kind: input, shape index: {}]
  %s2 = inlined_call_operand.hbm [shape: f32[8,32], index: 2, kind: input, shape index: {}]
  %s3 = inlined_call_operand.hbm [shape: f32[16,32], index: 3, kind: output, shape index: {}]
  %s4 = sld [smem:[#allocation0]]
  $region49: #{tpu_custom_call.1} parent=0
    _
  %s6 = ssub.s32 1, %s4
  %s7 = scalar_select 0, %s6, %s4
  %9 = dma.hbm_to_smem %s0, 16, [#allocation3], [#allocation2]
  %10 = dma.done [#allocation2], 16
  %11 = sfence
  $region1: #{tpu_custom_call.1} parent=0
    #allocation4 [shape = 'u8[16384]{0}', space=vmem, size = 0x4000, scoped, tag = 'input window, operand 1, single buffered']
    #allocation5 [shape = 's32[2]{0}', space=sflag, size = 0x8, scoped, tag = 'scoped memory for tpu_custom_call.1']
    #allocation6 [shape = 's32[2]{0}', space=sflag, size = 0x8, scoped, tag = 'scoped memory for tpu_custom_call.1']
    #allocation7 [shape = 'u8[4096]{0}', space=vmem, size = 0x1000, scoped, tag = 'input window, operand 2, single buffered']
    #allocation8 [shape = 's32[1]{0}', space=sflag, size = 0x4, scoped, tag = 'scoped memory for tpu_custom_call.1']
    #allocation9 [shape = 'u8[8192]{0}', space=vmem, size = 0x2000, scoped, tag = 'output window, operand 0']
    %12 = vsyncpa [#allocation5], 0
    %13 = vsyncpa [#allocation8], 0
    %14 = vsyncpa [#allocation6], 0
    %s15 = scalar_lea.sflag [#allocation6], 1
    %16 = vsyncpa %s15, 0
    loop: start=0, step=1, limit=4
    $region2: #{tpu_custom_call.1} parent=1 // loop_pre_header
      _
    $region3: #{tpu_custom_call.1} parent=1 // loop_header
      %s18 = sphi 0, %s22
      %p19 = scmp.ge.s32.totalorder %s18, 4
      %s25 = sphi 0, %s37
      %s26 = sphi 0, %s33
      %s27 = sphi 0, %s25
      %s28 = sphi 0, %s26
      %s29 = sphi 0, %s27
      %s30 = sphi 0, %s28
      %s38 = sphi 0, %s38
      %s40 = sphi 0, %s38
      %s41 = sphi 0, %s40
      %s55 = sphi 0, %s41
      %s59 = sphi 0, %s59
      %s61 = sphi 0, %s59
      %s62 = sphi 0, %s61
      %s76 = sphi 0, %s62
      %s86 = sphi 0, %s88
      %s89 = sphi 0, %s86
      %s90 = sphi 0, %s89
      %s106 = sphi 0, %s90
    $region4: #{tpu_custom_call.1} parent=1 // loop_header_branch
      %21 = sbr.rel (%p19) target = $region8
    $region5: #{tpu_custom_call.1} parent=1 // loop_body
      %s23 = ssub.s32 %s18, 1
      %s24 = ssub.s32 %s18, 2
      %s31 = sadd.s32 1, %s26
      %p32 = scmp.ge.s32.totalorder %s31, 2
      %s33 = scalar_select %p32, 0, %s31
      %s34 = sadd.s32 1, %s25
      %s35 = scalar_select %p32, %s34, %s25
      %p36 = scmp.ge.s32.totalorder %s35, 1
      %s37 = scalar_select %p36, 0, %s35
      %s39 = sadd.s32 %s38, 1
      %p42 = scmp.eq.s32.totalorder %s18, 1
      %p43 = scmp.ne.s32.totalorder %s38, %s40
      %p44 = scmp.eq.s32.totalorder %s18, 0
      %p45 = por %p43, %p44
      %p46 = scmp.ne.s32.totalorder %s38, %s40
      %p47 = scmp.eq.s32.totalorder %s23, 1
      %p48 = por %p46, %p47
      %p49 = scmp.ne.s32.totalorder %s40, %s41
      %p50 = scmp.eq.s32.totalorder %s23, 0
      %p51 = por %p49, %p50
      %p52 = scmp.ne.s32.totalorder %s40, %s41
      %p53 = scmp.eq.s32.totalorder %s24, 1
      %p54 = por %p52, %p53
      %p56 = scmp.ne.s32.totalorder %s41, %s55
      %p57 = scmp.eq.s32.totalorder %s24, 0
      %p58 = por %p56, %p57
      %s60 = sadd.s32 %s59, 1
      %p63 = scmp.eq.s32.totalorder %s18, 1
      %p64 = scmp.ne.s32.totalorder %s59, %s61
      %p65 = scmp.eq.s32.totalorder %s18, 0
      %p66 = por %p64, %p65
      %p67 = scmp.ne.s32.totalorder %s59, %s61
      %p68 = scmp.eq.s32.totalorder %s23, 1
      %p69 = por %p67, %p68
      %p70 = scmp.ne.s32.totalorder %s61, %s62
      %p71 = scmp.eq.s32.totalorder %s23, 0
      %p72 = por %p70, %p71
      %p73 = scmp.ne.s32.totalorder %s61, %s62
      %p74 = scmp.eq.s32.totalorder %s24, 1
      %p75 = por %p73, %p74
      %p77 = scmp.ne.s32.totalorder %s62, %s76
      %p78 = scmp.eq.s32.totalorder %s24, 0
      %p79 = por %p77, %p78
      %s80 = smul.u32 %s25, 2
      %s81 = sadd.s32 %s80, %s26
      %s82 = smul.u32 %s37, 2
      %s83 = sadd.s32 %s82, %s33
      %s84 = ssub.s32 %s81, %s83
      %p85 = scmp.eq.s32.totalorder %s84, 0
      %s87 = sadd.s32 %s86, 1
      %s88 = scalar_select %p85, %s86, %s87
      %p91 = pneg %p85
      %p92 = scmp.eq.s32.totalorder %s18, 1
      %p93 = por %p91, %p92
      %p94 = scmp.ne.s32.totalorder %s86, %s89
      %p95 = scmp.eq.s32.totalorder %s18, 0
      %p96 = por %p94, %p95
      %p97 = scmp.ne.s32.totalorder %s86, %s89
      %p98 = scmp.eq.s32.totalorder %s23, 1
      %p99 = por %p97, %p98
      %p100 = scmp.ne.s32.totalorder %s89, %s90
      %p101 = scmp.eq.s32.totalorder %s23, 0
      %p102 = por %p100, %p101
      %p103 = scmp.ne.s32.totalorder %s89, %s90
      %p104 = scmp.eq.s32.totalorder %s24, 1
      %p105 = por %p103, %p104
      %p107 = scmp.ne.s32.totalorder %s90, %s106
      %p108 = scmp.eq.s32.totalorder %s24, 0
      %p109 = por %p107, %p108
      %p110 = scmp.le.s32.totalorder 1, %s18
      %p111 = scmp.lt.s32.totalorder %s18, 3
      %p112 = pnand %p110, %p111
      %p113 = pneg %p112
      // Predicated region
      $region9: #{tpu_custom_call.1} parent=5 // pred_check
        _
      $region10: #{tpu_custom_call.1} parent=5 // pred_check_branch
        %115 = sbr.rel (%p112) target = $region12
      $region11: #{tpu_custom_call.1} parent=5 // pred_region
        %s116 = ssub.s32 %s18, 1
        // Predicated region
        $region13: #{tpu_custom_call.1} parent=11 // pred_check
          %p117 = pneg %p51
        $region14: #{tpu_custom_call.1} parent=11 // pred_check_branch
          %119 = sbr.rel (%p117) target = $region16
        $region15: #{tpu_custom_call.1} parent=11 // pred_region
          %s121 = ssub.s32 512, 512
          %122 = vsyncadd [#allocation5], %s121
          %s123 = sshll.u32 [#allocation4], 4
          %s124 = int_to_ptr.vmem [resolvable:$true] %s123
          %129 = dma.hbm_to_vmem [thread:$0]  %s1, 512, %s124, [#allocation5], 128, 128, 8
        $region16: #{tpu_custom_call.1} parent=11 // pred_fallthru
          _
        // Predicated region
        $region17: #{tpu_custom_call.1} parent=11 // pred_check
          %p130 = pneg %p72
        $region18: #{tpu_custom_call.1} parent=11 // pred_check_branch
          %132 = sbr.rel (%p130) target = $region20
        $region19: #{tpu_custom_call.1} parent=11 // pred_region
          %s134 = ssub.s32 128, 128
          %135 = vsyncadd [#allocation8], %s134
          %s137 = sshll.u32 [#allocation7], 4
          %s138 = int_to_ptr.vmem [resolvable:$true] %s137
          %140 = dma.hbm_to_vmem [thread:$0]  %s2, 128, %s138, [#allocation8]
        $region20: #{tpu_custom_call.1} parent=11 // pred_fallthru
          _
      $region12: #{tpu_custom_call.1} parent=5 // pred_fallthru
        _
      %p141 = scmp.lt.s32.totalorder %s18, 2
      // Predicated region
      $region21: #{tpu_custom_call.1} parent=5 // pred_check
        %p142 = pneg %p141
      $region22: #{tpu_custom_call.1} parent=5 // pred_check_branch
        %144 = sbr.rel (%p142) target = $region24
      $region23: #{tpu_custom_call.1} parent=5 // pred_region
        _
      $region24: #{tpu_custom_call.1} parent=5 // pred_fallthru
        _
      %p145 = scmp.le.s32.totalorder 1, %s18
      %p146 = scmp.lt.s32.totalorder %s18, 3
      %p147 = pnand %p145, %p146
      %p148 = pneg %p147
      // Predicated region
      $region25: #{tpu_custom_call.1} parent=5 // pred_check
        _
      $region26: #{tpu_custom_call.1} parent=5 // pred_check_branch
        %150 = sbr.rel (%p147) target = $region28
      $region27: #{tpu_custom_call.1} parent=5 // pred_region
        %s151 = ssub.s32 %s18, 1
        // Predicated region
        $region29: #{tpu_custom_call.1} parent=27 // pred_check
          %p152 = pneg %p51
        $region30: #{tpu_custom_call.1} parent=27 // pred_check_branch
          %154 = sbr.rel (%p152) target = $region32
        $region31: #{tpu_custom_call.1} parent=27 // pred_region
          %155 = dma.done [#allocation5], 512
        $region32: #{tpu_custom_call.1} parent=27 // pred_fallthru
          _
        // Predicated region
        $region33: #{tpu_custom_call.1} parent=27 // pred_check
          %p156 = pneg %p72
        $region34: #{tpu_custom_call.1} parent=27 // pred_check_branch
          %158 = sbr.rel (%p156) target = $region36
        $region35: #{tpu_custom_call.1} parent=27 // pred_region
          %159 = dma.done [#allocation8], 128
        $region36: #{tpu_custom_call.1} parent=27 // pred_fallthru
          _
        %p160 = pneg %p51
        %p161 = pneg %p48
        %p162 = pneg %p72
        %p163 = pneg %p69
        %p164 = pneg %p102
        %p165 = pneg %p99
        %s166 = sand.u32 %s89, 1
        %s167 = scalar_lea.sflag [#allocation6], %s166
        %s168 = sand.u32 %s89, 1
        %s169 = smul.addr %s168, 8
        %s170 = scalar_lea.vmem [#allocation9], %s169
        %s171 = smul.u32 %s27, 2
        %s172 = sadd.s32 %s171, %s28
        %s173 = smul.u32 %s27, 2
        %s174 = sadd.s32 %s173, %s28
        %s175 = smul.u32 %s174, 8
        %s176 = sld [smem:[#allocation3 + %s175]]
        %s177 = scalar_lea.vmem [#allocation4], %s176
        %v178 = vld [vmem:[%s177] sm:$0x1]
        %vm179 = vcmask 253952
        %180 = vst.msk [vmem:[%s170] sm:$0x1] %vm179, %v178
        %s181 = sadd.s32 %s175, 1
        %s182 = sld [smem:[#allocation3 + %s181]]
        %s183 = scalar_lea.vmem [#allocation4], %s182
        %v184 = vld [vmem:[%s183] sm:$0x1]
        %185 = vst.msk [vmem:[%s170 + $0x1] sm:$0x1] %vm179, %v184
        %s186 = sadd.s32 %s175, 2
        %s187 = sld [smem:[#allocation3 + %s186]]
        %s188 = scalar_lea.vmem [#allocation4], %s187
        %v189 = vld [vmem:[%s188] sm:$0x1]
        %190 = vst.msk [vmem:[%s170 + $0x2] sm:$0x1] %vm179, %v189
        %s191 = sadd.s32 %s175, 3
        %s192 = sld [smem:[#allocation3 + %s191]]
        %s193 = scalar_lea.vmem [#allocation4], %s192
        %v194 = vld [vmem:[%s193] sm:$0x1]
        %195 = vst.msk [vmem:[%s170 + $0x3] sm:$0x1] %vm179, %v194
        %s196 = sadd.s32 %s175, 4
        %s197 = sld [smem:[#allocation3 + %s196]]
        %s198 = scalar_lea.vmem [#allocation4], %s197
        %v199 = vld [vmem:[%s198] sm:$0x1]
        %200 = vst.msk [vmem:[%s170 + $0x4] sm:$0x1] %vm179, %v199
        %s201 = sadd.s32 %s175, 5
        %s202 = sld [smem:[#allocation3 + %s201]]
        %s203 = scalar_lea.vmem [#allocation4], %s202
        %v204 = vld [vmem:[%s203] sm:$0x1]
        %205 = vst.msk [vmem:[%s170 + $0x5] sm:$0x1] %vm179, %v204
        %s206 = sadd.s32 %s175, 6
        %s207 = sld [smem:[#allocation3 + %s206]]
        %s208 = scalar_lea.vmem [#allocation4], %s207
        %v209 = vld [vmem:[%s208] sm:$0x1]
        %210 = vst.msk [vmem:[%s170 + $0x6] sm:$0x1] %vm179, %v209
        %s211 = sadd.s32 %s175, 7
        %s212 = sld [smem:[#allocation3 + %s211]]
        %s213 = scalar_lea.vmem [#allocation4], %s212
        %v214 = vld [vmem:[%s213] sm:$0x1]
        %215 = vst.msk [vmem:[%s170 + $0x7] sm:$0x1] %vm179, %v214
        %v216 = vld [vmem:[%s170] sm:$0xff]
        %v217 = vld [vmem:[#allocation7] sm:$0xff]
        %v218 = vadd.f32 %v216, %v217
        %vm219 = vcmask 261120
        %220 = vst.msk [vmem:[%s170] sm:$0xff] %vm219, %v218
        %s221 = sand.u32 %s89, 1
        %s222 = scalar_lea.sflag [#allocation6], %s221
        %s223 = sand.u32 %s89, 1
        %s224 = smul.addr %s223, 8
        %s225 = scalar_lea.vmem [#allocation9], %s224
        // Predicated region
        $region37: #{tpu_custom_call.1} parent=27 // pred_check
          %p226 = pneg %p99
        $region38: #{tpu_custom_call.1} parent=27 // pred_check_branch
          %228 = sbr.rel (%p226) target = $region40
        $region39: #{tpu_custom_call.1} parent=27 // pred_region
          %s229 = smul.u32 %s27, 2
          %s230 = sadd.s32 %s229, %s28
          %s232 = ssub.s32 128, 128
          %233 = vsyncadd %s222, %s232
          %s234 = smul.addr %s230, 128
          %s235 = scalar_lea.hbm %s3, %s234
          %s237 = sshll.u32 %s225, 4
          %s238 = int_to_ptr.vmem [resolvable:$true] %s237
          %240 = dma.vmem_to_hbm [thread:$0]  %s238, 128, %s235, %s222
        $region40: #{tpu_custom_call.1} parent=27 // pred_fallthru
          _
      $region28: #{tpu_custom_call.1} parent=5 // pred_fallthru
        _
      %p241 = scmp.le.s32.totalorder 2, %s18
      // Predicated region
      $region41: #{tpu_custom_call.1} parent=5 // pred_check
        %p242 = pneg %p241
      $region42: #{tpu_custom_call.1} parent=5 // pred_check_branch
        %244 = sbr.rel (%p242) target = $region44
      $region43: #{tpu_custom_call.1} parent=5 // pred_region
        %s245 = ssub.s32 %s18, 2
        // Predicated region
        $region45: #{tpu_custom_call.1} parent=43 // pred_check
          %p246 = pneg %p105
        $region46: #{tpu_custom_call.1} parent=43 // pred_check_branch
          %248 = sbr.rel (%p246) target = $region48
        $region47: #{tpu_custom_call.1} parent=43 // pred_region
          %s249 = sand.u32 %s90, 1
          %s250 = scalar_lea.sflag [#allocation6], %s249
          %s251 = sand.u32 %s90, 1
          %s252 = smul.addr %s251, 8
          %s253 = scalar_lea.vmem [#allocation9], %s252
          %254 = dma.done %s250, 128
        $region48: #{tpu_custom_call.1} parent=43 // pred_fallthru
          _
      $region44: #{tpu_custom_call.1} parent=5 // pred_fallthru
        _
    $region6: #{tpu_custom_call.1} parent=1 // loop_footer
      %s22 = sadd.s32 1, %s18
    $region7: #{tpu_custom_call.1} parent=1 // loop_footer_branch
      %17 = sbr.rel target = $region3
    $region8: #{tpu_custom_call.1} parent=1 // loop_exit
      _
    %255 = vsyncpa [#allocation5], 1
    %s256 = scalar_lea.sflag [#allocation5], 1
    %257 = vsyncpa %s256, 1
    %258 = vsyncpa [#allocation8], 1
    %259 = vsyncpa [#allocation6], 1
    %s260 = scalar_lea.sflag [#allocation6], 1
    %261 = vsyncpa %s260, 1

</llo_original>
